<compile_context>
chip_gen: v7x
topology: tpu7x:2x2x1
jax: 0.10.0
libtpu: 0.0.40
codegen_flags: <defaults>
</compile_context>

<pallas_src>
import functools
import math

import jax
import jax.numpy as jnp
from jax import lax
from jax.experimental import pallas as pl
from jax.experimental.pallas import tpu as pltpu


def _round_up(x, m):
    return ((x + m - 1) // m) * m


# ----------------------------- Pallas kernel -------------------------------
def _emb_kernel(ids_ref, tok_ref, pos_ref, *rest, tb, seq_len, p):
    """One grid step = TB flattened tokens.

    ids_ref : SMEM scalar-prefetch ref, flattened (padded) token ids.
    tok_ref : (V, D) token-embedding table, VMEM resident.
    pos_ref : (S, D) positional table (first S rows), VMEM resident.
    rest    : (rand_ref,) out_ref   if dropout enabled
              out_ref                otherwise
    """
    if p > 0.0:
        rand_ref, out_ref = rest
    else:
        (out_ref,) = rest

    base = pl.program_id(0) * tb

    # Gather TB embedding rows from the VMEM-resident tables into the dense
    # (TB, D) output tile.
    def body(j, carry):
        tok_id = ids_ref[base + j]
        pos_id = (base + j) % seq_len
        row = (tok_ref[pl.ds(tok_id, 1), :].astype(jnp.float32)
               + pos_ref[pl.ds(pos_id, 1), :].astype(jnp.float32))
        out_ref[pl.ds(j, 1), :] = row.astype(out_ref.dtype)
        return carry

    lax.fori_loop(0, tb, body, 0)

    if p > 0.0:
        # Inverted dropout over the whole (TB, D) block: one compare + select.
        blk = out_ref[...]
        keep = rand_ref[...] >= jnp.float32(p)
        out_ref[...] = jnp.where(
            keep, blk * jnp.float32(1.0 / (1.0 - p)), jnp.float32(0.0)
        ).astype(out_ref.dtype)


# ------------------------------- wrapper ------------------------------------
def transformer_embedding(tokens, tok_table, pos_table, *,
                          dropout_rate=0.0, rng_key=None):
    """tokens: (B, S) int; tok_table: (V, D); pos_table: (max_len, D) -> (B, S, D)."""
    B, S = tokens.shape
    V, D = tok_table.shape
    assert S <= pos_table.shape[0], "sequence longer than positional table"
    assert 0.0 <= dropout_rate < 1.0, "dropout_rate must be in [0, 1)"

    N = B * S
    TB = min(256, _round_up(N, 8))      # tokens per grid step (multiple of 8)
    N_pad = _round_up(N, TB)

    ids = jnp.zeros((N_pad,), dtype=jnp.int32)
    ids = ids.at[:N].set(tokens.reshape(N).astype(jnp.int32))

    tok_table = tok_table.astype(jnp.float32)
    pos_sub = pos_table[:S].astype(jnp.float32)

    use_dropout = dropout_rate > 0.0
    inputs = [ids, tok_table, pos_sub]
    in_specs = [
        # token-embedding table: full array, VMEM resident (constant index_map)
        pl.BlockSpec((V, D), lambda i, ids_ref: (0, 0)),
        # positional table (first S rows): full array, VMEM resident
        pl.BlockSpec((S, D), lambda i, ids_ref: (0, 0)),
    ]
    if use_dropout:
        if rng_key is None:
            rng_key = jax.random.PRNGKey(0)
        rand = jax.random.uniform(rng_key, (N_pad, D), dtype=jnp.float32)
        inputs.append(rand)
        in_specs.append(pl.BlockSpec((TB, D), lambda i, ids_ref: (i, 0)))

    kernel = functools.partial(_emb_kernel, tb=TB, seq_len=S,
                               p=float(dropout_rate))

    out_flat = pl.pallas_call(
        kernel,
        out_shape=jax.ShapeDtypeStruct((N_pad, D), jnp.float32),
        grid_spec=pltpu.PrefetchScalarGridSpec(
            num_scalar_prefetch=1,          # token ids land in SMEM
            grid=(N_pad // TB,),
            in_specs=in_specs,
            out_specs=pl.BlockSpec((TB, D), lambda i, ids_ref: (i, 0)),
        ),
        compiler_params=pltpu.CompilerParams(
            dimension_semantics=("parallel",),
            vmem_limit_bytes=64 * 1024 * 1024,
        ),
    )(*inputs)

    return out_flat[:N].reshape(B, S, D)


# -------------------------- parameter construction --------------------------
def make_token_embedding(key, vocab_size, embedding_dim):
    # nn.Embedding default init: N(0, 1)
    return jax.random.normal(key, (vocab_size, embedding_dim), dtype=jnp.float32)


def make_positional_encoding(embedding_dim, max_len):
    # Classic sinusoidal positional encoding.
    pos = jnp.arange(max_len, dtype=jnp.float32)[:, None]          # (L, 1)
    idx = jnp.arange(0, embedding_dim, 2, dtype=jnp.float32)       # (D/2,)
    div = jnp.exp(-math.log(10000.0) * idx / embedding_dim)        # 10000^(-2i/D)
    pe = jnp.zeros((max_len, embedding_dim), dtype=jnp.float32)
    pe = pe.at[:, 0::2].set(jnp.sin(pos * div))
    pe = pe.at[:, 1::2].set(jnp.cos(pos * div))
    return pe


# --------------------------------- main --------------------------------------
if __name__ == "__main__":
    vocab_size, embedding_dim, max_len = 50, 32, 16
    B, S = 2, 8
    dropout_rate = 0.1

    key = jax.random.PRNGKey(0)
    k_emb, k_tok, k_drop = jax.random.split(key, 3)

    tok_table = make_token_embedding(k_emb, vocab_size, embedding_dim)
    pos_table = make_positional_encoding(embedding_dim, max_len)
    tokens = jax.random.randint(k_tok, (B, S), 0, vocab_size, dtype=jnp.int32)

    # Correctness check with dropout disabled (deterministic path).
    out_nodrop = transformer_embedding(tokens, tok_table, pos_table,
                                       dropout_rate=0.0)
    jax.block_until_ready(out_nodrop)
    ref = tok_table[tokens] + pos_table[:S][None, :, :]
    assert jnp.allclose(out_nodrop, ref, atol=1e-5, rtol=1e-5), \
        "mismatch vs reference"

    # Run with dropout active (stochastic, mask seeded from a JAX key).
    out = transformer_embedding(tokens, tok_table, pos_table,
                                dropout_rate=dropout_rate, rng_key=k_drop)
    jax.block_until_ready(out)
    assert out.shape == (B, S, embedding_dim)
    assert bool(jnp.all(jnp.isfinite(out)))

    print("KERNEL_OK")
</pallas_src>

<mosaic_0001>
module attributes {stable_mosaic.version = 11 : i64} {
  func.func @_emb_kernel(%arg0: i32, %arg1: memref<16xi32, #tpu.memory_space<smem>>, %arg2: memref<50x32xf32, #tpu.memory_space<vmem>>, %arg3: memref<8x32xf32, #tpu.memory_space<vmem>>, %arg4: memref<16x32xf32, #tpu.memory_space<vmem>>) attributes {dimension_semantics = [#tpu.dimension_semantics<parallel>], iteration_bounds = array<i64: 1>, scalar_prefetch = 1 : i64, scratch_operands = 0 : i64, tpu.core_type = #tpu.core_type<tc>, window_params = [{pipeline_mode = #tpu.pipeline_mode<synchronous>, transform_indices = @transform_0, window_bounds = array<i64: 50, 32>}, {pipeline_mode = #tpu.pipeline_mode<synchronous>, transform_indices = @transform_1, window_bounds = array<i64: 8, 32>}, {transform_indices = @transform_2, window_bounds = array<i64: 16, 32>}]} {
    %c16_i32 = arith.constant 16 : i32
    %0 = arith.muli %arg0, %c16_i32 : i32
    %c0_i32 = arith.constant 0 : i32
    %c16_i32_0 = arith.constant 16 : i32
    %1 = arith.addi %c0_i32, %c16_i32_0 : i32
    %c1_i32 = arith.constant 1 : i32
    scf.for %arg5 = %c0_i32 to %1 step %c1_i32  : i32 {
      %2 = arith.addi %0, %arg5 : i32
      %3 = arith.index_cast %2 : i32 to index
      %4 = memref.load %arg1[%3] : memref<16xi32, #tpu.memory_space<smem>>
      %5 = arith.addi %0, %arg5 : i32
      %c8_i32 = arith.constant 8 : i32
      %c0_i32_2 = arith.constant 0 : i32
      %6 = arith.cmpi eq, %c8_i32, %c0_i32_2 : i32
      %c1_i32_3 = arith.constant 1 : i32
      %7 = arith.select %6, %c1_i32_3, %c8_i32 : i32
      %8 = arith.remsi %5, %7 : i32
      %c0_i32_4 = arith.constant 0 : i32
      %9 = arith.cmpi ne, %8, %c0_i32_4 : i32
      %c0_i32_5 = arith.constant 0 : i32
      %10 = arith.cmpi slt, %8, %c0_i32_5 : i32
      %c0_i32_6 = arith.constant 0 : i32
      %11 = arith.cmpi slt, %7, %c0_i32_6 : i32
      %12 = arith.xori %10, %11 : i1
      %13 = arith.andi %12, %9 : i1
      %14 = arith.addi %8, %7 : i32
      %15 = arith.select %13, %14, %8 : i32
      %16 = arith.index_cast %4 : i32 to index
      %c0 = arith.constant 0 : index
      %17 = vector.load %arg2[%16, %c0] : memref<50x32xf32, #tpu.memory_space<vmem>>, vector<1x32xf32>
      %18 = arith.index_cast %15 : i32 to index
      %c0_7 = arith.constant 0 : index
      %19 = vector.load %arg3[%18, %c0_7] : memref<8x32xf32, #tpu.memory_space<vmem>>, vector<1x32xf32>
      %20 = arith.addf %17, %19 : vector<1x32xf32>
      %21 = arith.index_cast %arg5 : i32 to index
      %c0_8 = arith.constant 0 : index
      %22 = vector.load %arg4[%21, %c0_8] : memref<16x32xf32, #tpu.memory_space<vmem>>, vector<1x32xf32>
      tpu.vector_store %arg4[%21, %c0_8], %20 {strides = array<i32>} : memref<16x32xf32, #tpu.memory_space<vmem>>, vector<1x32xf32>,
    }
    %c16_i32_1 = arith.constant 16 : i32
    return
  }
  func.func @transform_0(%arg0: i32, %arg1: memref<16xi32, #tpu.memory_space<smem>>) -> (i32, i32) {
    %c0_i32 = arith.constant 0 : i32
    %c0_i32_0 = arith.constant 0 : i32
    %c0_i32_1 = arith.constant 0 : i32
    return %c0_i32, %c0_i32_0 : i32, i32
  }
  func.func @transform_1(%arg0: i32, %arg1: memref<16xi32, #tpu.memory_space<smem>>) -> (i32, i32) {
    %c0_i32 = arith.constant 0 : i32
    %c0_i32_0 = arith.constant 0 : i32
    %c0_i32_1 = arith.constant 0 : i32
    return %c0_i32, %c0_i32_0 : i32, i32
  }
  func.func @transform_2(%arg0: i32, %arg1: memref<16xi32, #tpu.memory_space<smem>>) -> (i32, i32) {
    %c0_i32 = arith.constant 0 : i32
    %c0_i32_0 = arith.constant 0 : i32
    return %arg0, %c0_i32 : i32, i32
  }
}

</mosaic_0001>

<llo_original>
// kernel: tpu_custom_call.1
$region0: #{tpu_custom_call.1}
  #allocation0 [shape = 'u32[]', space=smem, size = 0x4, offset = 0x4, fixed_abs, tag = 'smem constant byte address 0x4 - core index']
  #allocation1 [shape = 'u32[144,128]{1,0:T(1,128)}', space=vmem, size = 0x12000, scoped, tag = 'internal scratch']
  #allocation2 [shape = 's32[1]{0}', space=sflag, size = 0x4, scoped, tag = 'scoped memory for tpu_custom_call.1']
  #allocation3 [shape = 'u8[512]{0}', space=smem, size = 0x200, scoped, tag = 'prefetched SMEM operand 0']
  %s0 = inlined_call_operand.hbm [shape: s32[16], index: 0, kind: input, shape index: {}]
  %s1 = inlined_call_operand.hbm [shape: f32[50,32], index: 1, kind: input, shape index: {}]
  %s2 = inlined_call_operand.hbm [shape: f32[8,32], index: 2, kind: input, shape index: {}]
  %s3 = inlined_call_operand.hbm [shape: f32[16,32], index: 3, kind: output, shape index: {}]
  %s4 = sld [smem:[#allocation0]]
  $region33: #{tpu_custom_call.1} parent=0
    _
  %s6 = ssub.s32 1, %s4
  %s7 = scalar_select 0, %s6, %s4
  %9 = dma.hbm_to_smem %s0, 16, [#allocation3], [#allocation2]
  %10 = dma.done [#allocation2], 16
  %11 = sfence
  $region1: #{tpu_custom_call.1} parent=0
    #allocation4 [shape = 'u8[28672]{0}', space=vmem, size = 0x7000, scoped, tag = 'input window, operand 1, single buffered']
    #allocation5 [shape = 's32[1]{0}', space=sflag, size = 0x4, scoped, tag = 'scoped memory for tpu_custom_call.1']
    #allocation6 [shape = 's32[1]{0}', space=sflag, size = 0x4, scoped, tag = 'scoped memory for tpu_custom_call.1']
    #allocation7 [shape = 'u8[4096]{0}', space=vmem, size = 0x1000, scoped, tag = 'input window, operand 2, single buffered']
    #allocation8 [shape = 's32[1]{0}', space=sflag, size = 0x4, scoped, tag = 'scoped memory for tpu_custom_call.1']
    #allocation9 [shape = 'u8[8192]{0}', space=vmem, size = 0x2000, scoped, tag = 'output window, operand 0, single buffered']
    %12 = vsyncpa [#allocation5], 0
    %13 = vsyncpa [#allocation8], 0
    %14 = vsyncpa [#allocation6], 0
    // Predicated region
    $region2: #{tpu_custom_call.1} parent=1 // pred_check
      _
    $region3: #{tpu_custom_call.1} parent=1 // pred_check_branch
      %16 = sbr.rel (0) target = $region5
    $region4: #{tpu_custom_call.1} parent=1 // pred_region
      %s18 = ssub.s32 896, 896
      %19 = vsyncadd [#allocation5], %s18
      %s20 = sshll.u32 [#allocation4], 4
      %s21 = int_to_ptr.vmem [resolvable:$true] %s20
      %26 = dma.hbm_to_vmem [thread:$0]  %s1, 896, %s21, [#allocation5], 128, 128, 8
    $region5: #{tpu_custom_call.1} parent=1 // pred_fallthru
      _
    // Predicated region
    $region6: #{tpu_custom_call.1} parent=1 // pred_check
      _
    $region7: #{tpu_custom_call.1} parent=1 // pred_check_branch
      %28 = sbr.rel (0) target = $region9
    $region8: #{tpu_custom_call.1} parent=1 // pred_region
      %s30 = ssub.s32 128, 128
      %31 = vsyncadd [#allocation8], %s30
      %s33 = sshll.u32 [#allocation7], 4
      %s34 = int_to_ptr.vmem [resolvable:$true] %s33
      %36 = dma.hbm_to_vmem [thread:$0]  %s2, 128, %s34, [#allocation8]
    $region9: #{tpu_custom_call.1} parent=1 // pred_fallthru
      _
    // Predicated region
    $region10: #{tpu_custom_call.1} parent=1 // pred_check
      _
    $region11: #{tpu_custom_call.1} parent=1 // pred_check_branch
      %38 = sbr.rel (0) target = $region13
    $region12: #{tpu_custom_call.1} parent=1 // pred_region
      %39 = dma.done [#allocation5], 896
    $region13: #{tpu_custom_call.1} parent=1 // pred_fallthru
      _
    // Predicated region
    $region14: #{tpu_custom_call.1} parent=1 // pred_check
      _
    $region15: #{tpu_custom_call.1} parent=1 // pred_check_branch
      %41 = sbr.rel (0) target = $region17
    $region16: #{tpu_custom_call.1} parent=1 // pred_region
      %42 = dma.done [#allocation8], 128
    $region17: #{tpu_custom_call.1} parent=1 // pred_fallthru
      _
    %s43 = smul.u32 0, 16
    loop: start=0, step=1, limit=16
    $region18: #{tpu_custom_call.1} parent=1 // loop_pre_header
      _
    $region19: #{tpu_custom_call.1} parent=1 // loop_header
      %s45 = sphi 0, %s49
      %p46 = scmp.ge.s32.totalorder %s45, 16
    $region20: #{tpu_custom_call.1} parent=1 // loop_header_branch
      %48 = sbr.rel (%p46) target = $region24
    $region21: #{tpu_custom_call.1} parent=1 // loop_body
      %s50 = sadd.s32 %s43, %s45
      %s51 = sld [smem:[#allocation3 + %s50]]
      %p52 = scmp.lt.s32.totalorder %s50, 0
      %s53 = ssub.s32 0, %s50
      %s54 = scalar_select %p52, %s53, %s50
      %s55 = sand.u32 %s54, 7
      %s56 = ssub.s32 0, %s55
      %s57 = scalar_select %p52, %s56, %s55
      %p58 = scmp.ne.s32.totalorder %s57, 0
      %p59 = scmp.lt.s32.totalorder %s57, 0
      %p60 = pnand %p59, %p58
      %p61 = pneg %p60
      %s62 = sadd.s32 %s57, 8
      %s63 = scalar_select %p61, %s62, %s57
      %s64 = scalar_lea.vmem [#allocation4], %s51
      %v65 = vld [vmem:[%s64] sm:$0x1]
      %s66 = scalar_lea.vmem [#allocation7], %s63
      %v67 = vld [vmem:[%s66] sm:$0x1]
      %v68 = vadd.f32 %v65, %v67
      %s69 = scalar_lea.vmem [#allocation9], %s45
      %vm70 = vcmask 253952
      %71 = vst.msk [vmem:[%s69] sm:$0x1] %vm70, %v68
    $region22: #{tpu_custom_call.1} parent=1 // loop_footer
      %s49 = sadd.s32 1, %s45
    $region23: #{tpu_custom_call.1} parent=1 // loop_footer_branch
      %44 = sbr.rel target = $region19
    $region24: #{tpu_custom_call.1} parent=1 // loop_exit
      _
    // Predicated region
    $region25: #{tpu_custom_call.1} parent=1 // pred_check
      _
    $region26: #{tpu_custom_call.1} parent=1 // pred_check_branch
      %73 = sbr.rel (0) target = $region28
    $region27: #{tpu_custom_call.1} parent=1 // pred_region
      %s75 = ssub.s32 256, 256
      %76 = vsyncadd [#allocation6], %s75
      %s77 = sshll.u32 [#allocation9], 4
      %s78 = int_to_ptr.vmem [resolvable:$true] %s77
      %83 = dma.vmem_to_hbm [thread:$0]  %s78, 256, %s3, [#allocation6], 128, 128, 8
    $region28: #{tpu_custom_call.1} parent=1 // pred_fallthru
      _
    // Predicated region
    $region29: #{tpu_custom_call.1} parent=1 // pred_check
      _
    $region30: #{tpu_custom_call.1} parent=1 // pred_check_branch
      %85 = sbr.rel (0) target = $region32
    $region31: #{tpu_custom_call.1} parent=1 // pred_region
      %86 = dma.done [#allocation6], 256
    $region32: #{tpu_custom_call.1} parent=1 // pred_fallthru
      _
    %87 = vsyncpa [#allocation5], 1
    %88 = vsyncpa [#allocation8], 1
    %89 = vsyncpa [#allocation6], 1

</llo_original>
